<compile_context>
chip_gen: v7x
topology: tpu7x:2x2x1
jax: 0.10.0
libtpu: 0.0.40
codegen_flags: <defaults>
</compile_context>

<pallas_src>
import functools

import jax
import jax.numpy as jnp
from jax.experimental import pallas as pl
from jax.experimental.pallas import tpu as pltpu

DEPTH = 8  # decorrelation delay depth (module default)

# Per-array tile-size cap; >4 MiB has measured diminishing returns.
_MAX_TILE_BYTES = 4 << 20


# ----------------------------- kernels --------------------------------------


def _roll32_kernel(x_ref, y_ref, *, shift):
    """32-bit element types: direct lane roll (time axis = axis 1)."""
    y_ref[...] = pltpu.roll(x_ref[...], shift=shift, axis=1)


def _roll_packed_kernel(x_ref, y_ref, *, shift):
    """Sub-32-bit fast path (no widening).

    bitcast packs 4/itemsize batch rows into each 32-bit word along the
    sublane axis; the lane (time) axis is untouched, so rolling the u32 view
    by `shift` lanes rolls every stream by `shift` bit positions.  The inverse
    bitcast unpacks the rows exactly, whatever Mosaic's sublane packing order.
    """
    x32 = pltpu.bitcast(x_ref[...], jnp.uint32)
    y32 = pltpu.roll(x32, shift=shift, axis=1)
    y_ref[...] = pltpu.bitcast(y32, y_ref.dtype)


def _roll_upcast_kernel(x_ref, y_ref, *, shift):
    """Fallback for sub-32-bit blocks shorter than a native sublane tile:
    widen to int32, roll, narrow.  ~8x tile of VMEM intermediates, so the
    planner gives this path a smaller tile."""
    x = x_ref[...].astype(jnp.int32)
    y_ref[...] = pltpu.roll(x, shift=shift, axis=1).astype(y_ref.dtype)


# ----------------------------- planning -------------------------------------


def _vmem_budget():
    """Scoped-VMEM budget for this kernel, generation-aware."""
    try:
        info = pltpu.get_tpu_info()
        cap = int(getattr(info, "vmem_capacity_bytes", 64 << 20))
    except Exception:  # no hardware query -> assume the smallest (v7x: 64 MiB)
        cap = 64 << 20
    # Half the physical VMEM, never above the 32 MiB default scoped limit
    # (explicitly setting it also lifts v5e's 16 MiB default).
    return int(min(cap // 2, 32 << 20))


def _plan(B, L, dtype):
    """Pick (kernel path, batch block height, vmem_limit_bytes)."""
    itemsize = dtype.itemsize
    sub_pack = 8 * max(1, 4 // itemsize)  # rows per native sublane tile: 8/16/32

    if itemsize == 4:
        path, inter = "direct", 2
    elif itemsize in (1, 2) and B >= sub_pack:
        path, inter = "packed", 2
    else:
        path, inter = "upcast", 2 + 8 // itemsize  # widened intermediates
    pack = sub_pack

    vmem_limit = _vmem_budget()
    usable = (vmem_limit * 3) // 4
    # footprint ~= block * (2 input bufs + 2 output bufs + intermediates)
    tile_bytes = max(1 << 20, min(_MAX_TILE_BYTES, usable // (4 + inter)))

    row_bytes = L * itemsize
    if pack * row_bytes * (4 + inter) > (vmem_limit * 9) // 10:
        # TODO(synk): tile L with a depth-wide halo (tiny second kernel for the
        # wrap) instead of failing for very long bit streams.
        raise NotImplementedError(
            f"time axis too long for a single row-block in VMEM (L={L})")

    block_b = max(pack, (tile_bytes // row_bytes) // pack * pack)
    if block_b >= B:
        if B >= 2 * pack:
            # Keep >=2 grid blocks: pipelining everywhere, dual-TC on v7x.
            block_b = -(-(B // 2) // pack) * pack
        elif path == "packed":
            block_b = pack  # B in [pack, 2*pack): one full sublane tile
        else:
            block_b = B  # full array extent is always a legal block dim
    return path, block_b, vmem_limit


# ----------------------------- wrapper ---------------------------------------


def decorr(x1: jax.Array, x2: jax.Array, depth: int = DEPTH):
    """Decorrelate two bit streams of shape (B, L), values in {0, 1}.

    Returns (y1, y2): y1 is stream 1 unchanged (no copy), y2 is stream 2
    delayed by `depth` positions (circular delay line).
    """
    assert x1.shape == x2.shape and x1.dtype == x2.dtype
    assert x2.ndim == 2, "expected (batch, stream_length) bit streams"
    B, L = x2.shape
    assert L % 128 == 0, "time axis must be lane-aligned (multiple of 128)"
    assert 0 <= depth < L

    path, block_b, vmem_limit = _plan(B, L, x2.dtype)
    kernel = {
        "direct": _roll32_kernel,
        "packed": _roll_packed_kernel,
        "upcast": _roll_upcast_kernel,
    }[path]

    grid = (pl.cdiv(B, block_b),)
    y2 = pl.pallas_call(
        functools.partial(kernel, shift=depth),
        out_shape=jax.ShapeDtypeStruct((B, L), x2.dtype),
        grid=grid,
        in_specs=[pl.BlockSpec((block_b, L), lambda i: (i, 0))],
        out_specs=pl.BlockSpec((block_b, L), lambda i: (i, 0)),
        compiler_params=pltpu.CompilerParams(
            dimension_semantics=("parallel",),
            vmem_limit_bytes=vmem_limit,
        ),
    )(x2)

    # Stream 1 is a pure passthrough: returned directly, no HBM round-trip.
    return x1, y2


# ----------------------------- demo / checks ---------------------------------


if __name__ == "__main__":
    key = jax.random.PRNGKey(0)
    k1, k2, k3 = jax.random.split(key, 3)

    # Case 1: default config -- int8 bit streams, packed-bitcast fast path.
    B, L = 64, 256
    bits = (jax.random.uniform(k1, (B, L)) < 0.5).astype(jnp.int8)
    y1, y2 = decorr(bits, bits, depth=DEPTH)
    jax.block_until_ready((y1, y2))
    assert jnp.array_equal(y1, bits)
    assert jnp.array_equal(y2, jnp.roll(bits, DEPTH, axis=-1))

    # Case 2: small batch (B < 32) int8 -> upcast fallback path, odd depth.
    b2 = (jax.random.uniform(k2, (8, 128)) < 0.5).astype(jnp.int8)
    _, z2 = decorr(b2, b2, depth=3)
    jax.block_until_ready(z2)
    assert jnp.array_equal(z2, jnp.roll(b2, 3, axis=-1))

    # Case 3: 32-bit streams -> direct roll path, depth=1.
    b3 = (jax.random.uniform(k3, (16, 128)) < 0.5).astype(jnp.int32)
    _, w2 = decorr(b3, b3, depth=1)
    jax.block_until_ready(w2)
    assert jnp.array_equal(w2, jnp.roll(b3, 1, axis=-1))

    print("KERNEL_OK")
</pallas_src>

<mosaic_0001>
module attributes {stable_mosaic.version = 11 : i64} {
  func.func @_roll_packed_kernel(%arg0: i32, %arg1: memref<32x256xi8, #tpu.memory_space<vmem>>, %arg2: memref<32x256xi8, #tpu.memory_space<vmem>>) attributes {dimension_semantics = [#tpu.dimension_semantics<parallel>], iteration_bounds = array<i64: 2>, scalar_prefetch = 0 : i64, scratch_operands = 0 : i64, tpu.core_type = #tpu.core_type<tc>, window_params = [{transform_indices = @transform_0, window_bounds = array<i64: 32, 256>}, {transform_indices = @transform_1, window_bounds = array<i64: 32, 256>}]} {
    %c0 = arith.constant 0 : index
    %c0_0 = arith.constant 0 : index
    %0 = vector.load %arg1[%c0, %c0_0] : memref<32x256xi8, #tpu.memory_space<vmem>>, vector<32x256xi8>
    %1 = tpu.bitcast %0 : vector<32x256xi8> -> vector<8x256xi32>
    %c8_i32 = arith.constant 8 : i32
    %2 = tpu.dynamic_rotate %1 by %c8_i32 dim 1 : vector<8x256xi32>, i32 -> vector<8x256xi32>
    %3 = tpu.bitcast %2 : vector<8x256xi32> -> vector<32x256xi8>
    %c0_1 = arith.constant 0 : index
    %c0_2 = arith.constant 0 : index
    %4 = vector.load %arg2[%c0_1, %c0_2] : memref<32x256xi8, #tpu.memory_space<vmem>>, vector<32x256xi8>
    tpu.vector_store %arg2[%c0_1, %c0_2], %3 {strides = array<i32>} : memref<32x256xi8, #tpu.memory_space<vmem>>, vector<32x256xi8>,
    return
  }
  func.func @transform_0(%arg0: i32) -> (i32, i32) {
    %c0_i32 = arith.constant 0 : i32
    %c0_i32_0 = arith.constant 0 : i32
    return %arg0, %c0_i32 : i32, i32
  }
  func.func @transform_1(%arg0: i32) -> (i32, i32) {
    %c0_i32 = arith.constant 0 : i32
    %c0_i32_0 = arith.constant 0 : i32
    return %arg0, %c0_i32 : i32, i32
  }
}

</mosaic_0001>

<llo_original>
// kernel: tpu_custom_call.1
$region0: #{tpu_custom_call.1}
  #allocation0 [shape = 'u32[]', space=smem, size = 0x4, offset = 0x4, fixed_abs, tag = 'smem constant byte address 0x4 - core index']
  #allocation1 [shape = 'u32[144,128]{1,0:T(1,128)}', space=vmem, size = 0x12000, scoped, tag = 'internal scratch']
  %s0 = inlined_call_operand.hbm [shape: s8[64,256], index: 0, kind: input, shape index: {}]
  %s1 = inlined_call_operand.hbm [shape: s8[64,256], index: 1, kind: output, shape index: {}]
  %s2 = sld [smem:[#allocation0]]
  $region41: #{tpu_custom_call.1} parent=0
    _
  %s4 = ssub.s32 1, %s2
  %s5 = scalar_select 0, %s4, %s2
  $region1: #{tpu_custom_call.1} parent=0
    #allocation2 [shape = 'u8[16384]{0}', space=vmem, size = 0x4000, scoped, tag = 'input window, operand 0']
    #allocation3 [shape = 's32[2]{0}', space=sflag, size = 0x8, scoped, tag = 'scoped memory for tpu_custom_call.1']
    #allocation4 [shape = 's32[2]{0}', space=sflag, size = 0x8, scoped, tag = 'scoped memory for tpu_custom_call.1']
    #allocation5 [shape = 'u8[16384]{0}', space=vmem, size = 0x4000, scoped, tag = 'output window, operand 0']
    %6 = vsyncpa [#allocation3], 0
    %s7 = scalar_lea.sflag [#allocation3], 1
    %8 = vsyncpa %s7, 0
    %9 = vsyncpa [#allocation4], 0
    %s10 = scalar_lea.sflag [#allocation4], 1
    %11 = vsyncpa %s10, 0
    loop: start=0, step=1, limit=4
    $region2: #{tpu_custom_call.1} parent=1 // loop_pre_header
      _
    $region3: #{tpu_custom_call.1} parent=1 // loop_header
      %s13 = sphi 0, %s17
      %p14 = scmp.ge.s32.totalorder %s13, 4
      %s23 = sphi 0, %s25
      %s26 = sphi 0, %s23
      %s27 = sphi 0, %s26
      %s43 = sphi 0, %s27
      %s49 = sphi 0, %s51
      %s52 = sphi 0, %s49
      %s53 = sphi 0, %s52
      %s69 = sphi 0, %s53
    $region4: #{tpu_custom_call.1} parent=1 // loop_header_branch
      %16 = sbr.rel (%p14) target = $region8
    $region5: #{tpu_custom_call.1} parent=1 // loop_body
      %s18 = ssub.s32 %s13, 1
      %s19 = ssub.s32 %s13, 2
      %s20 = sadd.s32 %s13, 1
      %s21 = ssub.s32 %s13, %s20
      %p22 = scmp.eq.s32.totalorder %s21, 0
      %s24 = sadd.s32 %s23, 1
      %s25 = scalar_select %p22, %s23, %s24
      %p28 = pneg %p22
      %p29 = scmp.eq.s32.totalorder %s13, 1
      %p30 = por %p28, %p29
      %p31 = scmp.ne.s32.totalorder %s23, %s26
      %p32 = scmp.eq.s32.totalorder %s13, 0
      %p33 = por %p31, %p32
      %p34 = scmp.ne.s32.totalorder %s23, %s26
      %p35 = scmp.eq.s32.totalorder %s18, 1
      %p36 = por %p34, %p35
      %p37 = scmp.ne.s32.totalorder %s26, %s27
      %p38 = scmp.eq.s32.totalorder %s18, 0
      %p39 = por %p37, %p38
      %p40 = scmp.ne.s32.totalorder %s26, %s27
      %p41 = scmp.eq.s32.totalorder %s19, 1
      %p42 = por %p40, %p41
      %p44 = scmp.ne.s32.totalorder %s27, %s43
      %p45 = scmp.eq.s32.totalorder %s19, 0
      %p46 = por %p44, %p45
      %s47 = ssub.s32 %s13, %s20
      %p48 = scmp.eq.s32.totalorder %s47, 0
      %s50 = sadd.s32 %s49, 1
      %s51 = scalar_select %p48, %s49, %s50
      %p54 = pneg %p48
      %p55 = scmp.eq.s32.totalorder %s13, 1
      %p56 = por %p54, %p55
      %p57 = scmp.ne.s32.totalorder %s49, %s52
      %p58 = scmp.eq.s32.totalorder %s13, 0
      %p59 = por %p57, %p58
      %p60 = scmp.ne.s32.totalorder %s49, %s52
      %p61 = scmp.eq.s32.totalorder %s18, 1
      %p62 = por %p60, %p61
      %p63 = scmp.ne.s32.totalorder %s52, %s53
      %p64 = scmp.eq.s32.totalorder %s18, 0
      %p65 = por %p63, %p64
      %p66 = scmp.ne.s32.totalorder %s52, %s53
      %p67 = scmp.eq.s32.totalorder %s19, 1
      %p68 = por %p66, %p67
      %p70 = scmp.ne.s32.totalorder %s53, %s69
      %p71 = scmp.eq.s32.totalorder %s19, 0
      %p72 = por %p70, %p71
      %p73 = scmp.le.s32.totalorder 1, %s13
      %p74 = scmp.lt.s32.totalorder %s13, 3
      %p75 = pnand %p73, %p74
      %p76 = pneg %p75
      // Predicated region
      $region9: #{tpu_custom_call.1} parent=5 // pred_check
        _
      $region10: #{tpu_custom_call.1} parent=5 // pred_check_branch
        %78 = sbr.rel (%p75) target = $region12
      $region11: #{tpu_custom_call.1} parent=5 // pred_region
        %s79 = ssub.s32 %s13, 1
      $region12: #{tpu_custom_call.1} parent=5 // pred_fallthru
        _
      %p80 = scmp.lt.s32.totalorder %s13, 2
      // Predicated region
      $region13: #{tpu_custom_call.1} parent=5 // pred_check
        %p81 = pneg %p80
      $region14: #{tpu_custom_call.1} parent=5 // pred_check_branch
        %83 = sbr.rel (%p81) target = $region16
      $region15: #{tpu_custom_call.1} parent=5 // pred_region
        // Predicated region
        $region17: #{tpu_custom_call.1} parent=15 // pred_check
          %p84 = pneg %p33
        $region18: #{tpu_custom_call.1} parent=15 // pred_check_branch
          %86 = sbr.rel (%p84) target = $region20
        $region19: #{tpu_custom_call.1} parent=15 // pred_region
          %s87 = sand.u32 %s23, 1
          %s88 = scalar_lea.sflag [#allocation3], %s87
          %s89 = sand.u32 %s23, 1
          %s90 = smul.addr %s89, 16
          %s91 = scalar_lea.vmem [#allocation2], %s90
          %s93 = ssub.s32 256, 256
          %94 = vsyncadd %s88, %s93
          %s95 = smul.addr %s13, 2
          %s96 = smul.addr %s95, 128
          %s97 = scalar_lea.hbm %s0, %s96
          %s99 = sshll.u32 %s91, 4
          %s100 = int_to_ptr.vmem [resolvable:$true] %s99
          %102 = dma.hbm_to_vmem [thread:$0]  %s97, 256, %s100, %s88
        $region20: #{tpu_custom_call.1} parent=15 // pred_fallthru
          _
      $region16: #{tpu_custom_call.1} parent=5 // pred_fallthru
        _
      %p103 = scmp.le.s32.totalorder 1, %s13
      %p104 = scmp.lt.s32.totalorder %s13, 3
      %p105 = pnand %p103, %p104
      %p106 = pneg %p105
      // Predicated region
      $region21: #{tpu_custom_call.1} parent=5 // pred_check
        _
      $region22: #{tpu_custom_call.1} parent=5 // pred_check_branch
        %108 = sbr.rel (%p105) target = $region24
      $region23: #{tpu_custom_call.1} parent=5 // pred_region
        %s109 = ssub.s32 %s13, 1
        %s110 = sand.u32 %s26, 1
        %s111 = scalar_lea.sflag [#allocation3], %s110
        %s112 = sand.u32 %s26, 1
        %s113 = smul.addr %s112, 16
        %s114 = scalar_lea.vmem [#allocation2], %s113
        // Predicated region
        $region25: #{tpu_custom_call.1} parent=23 // pred_check
          %p115 = pneg %p39
        $region26: #{tpu_custom_call.1} parent=23 // pred_check_branch
          %117 = sbr.rel (%p115) target = $region28
        $region27: #{tpu_custom_call.1} parent=23 // pred_region
          %118 = dma.done %s111, 256
        $region28: #{tpu_custom_call.1} parent=23 // pred_fallthru
          _
        %s119 = sand.u32 %s26, 1
        %s120 = scalar_lea.sflag [#allocation3], %s119
        %s121 = sand.u32 %s26, 1
        %s122 = smul.addr %s121, 16
        %s123 = scalar_lea.vmem [#allocation2], %s122
        %p124 = pneg %p39
        %p125 = pneg %p36
        %p126 = pneg %p65
        %p127 = pneg %p62
        %s128 = sand.u32 %s52, 1
        %s129 = scalar_lea.sflag [#allocation4], %s128
        %s130 = sand.u32 %s52, 1
        %s131 = smul.addr %s130, 16
        %s132 = scalar_lea.vmem [#allocation5], %s131
        %v133 = vld [vmem:[%s114] sm:$0xff]
        %v134 = vld [vmem:[%s114 + $0x8] sm:$0xff]
        %137 = vrot.lane.b32.xlu0 %v133, 8
        %v138 = vpop.permute.xlu0 %137
        %139 = vrot.lane.b32.xlu0 %v134, 8
        %v140 = vpop.permute.xlu0 %139
        %v141 = vlaneseq
        %v142 = vand.u32 %v141, 127
        %vm143 = vcmp.lt.s32.totalorder %v142, 8
        %v144 = vsel %vm143, %v138, %v140
        %v145 = vsel %vm143, %v140, %v138
        %148 = vst [vmem:[%s132] sm:$0xff] %v145
        %149 = vst [vmem:[%s132 + $0x8] sm:$0xff] %v144
        %s150 = sand.u32 %s52, 1
        %s151 = scalar_lea.sflag [#allocation4], %s150
        %s152 = sand.u32 %s52, 1
        %s153 = smul.addr %s152, 16
        %s154 = scalar_lea.vmem [#allocation5], %s153
        // Predicated region
        $region29: #{tpu_custom_call.1} parent=23 // pred_check
          %p155 = pneg %p62
        $region30: #{tpu_custom_call.1} parent=23 // pred_check_branch
          %157 = sbr.rel (%p155) target = $region32
        $region31: #{tpu_custom_call.1} parent=23 // pred_region
          %s159 = ssub.s32 256, 256
          %160 = vsyncadd %s151, %s159
          %s161 = smul.addr %s18, 2
          %s162 = smul.addr %s161, 128
          %s163 = scalar_lea.hbm %s1, %s162
          %s165 = sshll.u32 %s154, 4
          %s166 = int_to_ptr.vmem [resolvable:$true] %s165
          %168 = dma.vmem_to_hbm [thread:$0]  %s166, 256, %s163, %s151
        $region32: #{tpu_custom_call.1} parent=23 // pred_fallthru
          _
      $region24: #{tpu_custom_call.1} parent=5 // pred_fallthru
        _
      %p169 = scmp.le.s32.totalorder 2, %s13
      // Predicated region
      $region33: #{tpu_custom_call.1} parent=5 // pred_check
        %p170 = pneg %p169
      $region34: #{tpu_custom_call.1} parent=5 // pred_check_branch
        %172 = sbr.rel (%p170) target = $region36
      $region35: #{tpu_custom_call.1} parent=5 // pred_region
        %s173 = ssub.s32 %s13, 2
        // Predicated region
        $region37: #{tpu_custom_call.1} parent=35 // pred_check
          %p174 = pneg %p68
        $region38: #{tpu_custom_call.1} parent=35 // pred_check_branch
          %176 = sbr.rel (%p174) target = $region40
        $region39: #{tpu_custom_call.1} parent=35 // pred_region
          %s177 = sand.u32 %s53, 1
          %s178 = scalar_lea.sflag [#allocation4], %s177
          %s179 = sand.u32 %s53, 1
          %s180 = smul.addr %s179, 16
          %s181 = scalar_lea.vmem [#allocation5], %s180
          %182 = dma.done %s178, 256
        $region40: #{tpu_custom_call.1} parent=35 // pred_fallthru
          _
      $region36: #{tpu_custom_call.1} parent=5 // pred_fallthru
        _
    $region6: #{tpu_custom_call.1} parent=1 // loop_footer
      %s17 = sadd.s32 1, %s13
    $region7: #{tpu_custom_call.1} parent=1 // loop_footer_branch
      %12 = sbr.rel target = $region3
    $region8: #{tpu_custom_call.1} parent=1 // loop_exit
      _
    %183 = vsyncpa [#allocation3], 1
    %s184 = scalar_lea.sflag [#allocation3], 1
    %185 = vsyncpa %s184, 1
    %186 = vsyncpa [#allocation4], 1
    %s187 = scalar_lea.sflag [#allocation4], 1
    %188 = vsyncpa %s187, 1

</llo_original>
